<compile_context>
chip_gen: v6e
topology: v6e:2x2x1
jax: 0.10.0
libtpu: 0.0.40
codegen_flags: <defaults>
</compile_context>

<pallas_src>
import functools

import jax
import jax.numpy as jnp
from jax.experimental import pallas as pl
from jax.experimental.pallas import tpu as pltpu

LANE = 128
SUBLANE = 8
TB_TARGET = 1024  # batch-tile rows per grid step (multiple of 8)


def _round_up(x, m):
    return (x + m - 1) // m * m


def _policy_kernel(x_ref, w1_ref, b1_ref, w2_ref, b2_ref, o_ref, *, action_bound):
    # Layer 1: bf16 MXU matmul, f32 accumulate; bias + ReLU in f32 (VPU).
    h = jnp.dot(x_ref[...], w1_ref[...], preferred_element_type=jnp.float32)
    h = jnp.maximum(h + b1_ref[...], 0.0)
    # Layer 2: cast activations to bf16 for the MXU, accumulate f32.
    a = jnp.dot(h.astype(w2_ref.dtype), w2_ref[...], preferred_element_type=jnp.float32)
    a = a + b2_ref[...]
    # tanh lowers to the EUP slot (free next to MXU/DMA); scale is fused here.
    o_ref[...] = (jnp.tanh(a) * action_bound).astype(o_ref.dtype)


def prepare_params(w1, b1, w2, b2):
    """Pad hidden/action dims to lane-dense multiples of 128 and cast weights to
    bf16.  Do this once, outside the hot path.  w1:(S,H) w2:(H,A) (in,out)."""
    state_dim, hidden_dim = w1.shape
    action_dim = w2.shape[1]
    hp = _round_up(hidden_dim, LANE)
    ap = _round_up(action_dim, LANE)
    w1p = jnp.zeros((state_dim, hp), jnp.float32).at[:, :hidden_dim].set(w1)
    b1p = jnp.zeros((1, hp), jnp.float32).at[:, :hidden_dim].set(b1.reshape(1, -1))
    w2p = jnp.zeros((hp, ap), jnp.float32).at[:hidden_dim, :action_dim].set(w2)
    b2p = jnp.zeros((1, ap), jnp.float32).at[:, :action_dim].set(b2.reshape(1, -1))
    return (w1p.astype(jnp.bfloat16), b1p, w2p.astype(jnp.bfloat16), b2p)


def policy_net_forward(state, w1p, b1p, w2p, b2p, *, action_dim, action_bound):
    """state: (B, state_dim) float; params from prepare_params()."""
    B, state_dim = state.shape
    hp = w1p.shape[1]
    ap = w2p.shape[1]

    # Batch tile: big enough to pipeline state DMA against MXU, multiple of 8.
    b_pad = _round_up(B, SUBLANE)
    tb = min(TB_TARGET, b_pad)
    b_pad = _round_up(b_pad, tb)
    grid = (b_pad // tb,)

    # bf16 state halves the dominant HBM traffic at large batch; in production
    # feed bf16 directly so this cast/pad does not cost an extra HBM pass.
    x = state.astype(jnp.bfloat16)
    if b_pad != B:
        x = jnp.zeros((b_pad, state_dim), jnp.bfloat16).at[:B].set(x)

    kernel = functools.partial(_policy_kernel, action_bound=float(action_bound))
    out = pl.pallas_call(
        kernel,
        out_shape=jax.ShapeDtypeStruct((b_pad, ap), jnp.float32),
        grid=grid,
        in_specs=[
            pl.BlockSpec((tb, state_dim), lambda i: (i, 0)),   # state: streamed per tile
            pl.BlockSpec((state_dim, hp), lambda i: (0, 0)),   # w1: VMEM-resident
            pl.BlockSpec((1, hp), lambda i: (0, 0)),           # b1: VMEM-resident
            pl.BlockSpec((hp, ap), lambda i: (0, 0)),          # w2: VMEM-resident
            pl.BlockSpec((1, ap), lambda i: (0, 0)),           # b2: VMEM-resident
        ],
        out_specs=pl.BlockSpec((tb, ap), lambda i: (i, 0)),    # lane-dense (128-wide)
        compiler_params=pltpu.CompilerParams(
            dimension_semantics=("parallel",),  # v7x: shard batch over 2 TCs
        ),
    )(x, w1p, b1p, w2p, b2p)
    # Slice away batch / action padding.
    return out[:B, :action_dim]


def init_params(key, state_dim, hidden_dim, action_dim):
    """Deterministic synthetic init (uniform, PyTorch-Linear-like bounds).
    Weights stored pre-transposed as (in_dim, out_dim)."""
    k1, k2, k3, k4 = jax.random.split(key, 4)
    lim1 = 1.0 / jnp.sqrt(state_dim)
    lim2 = 1.0 / jnp.sqrt(hidden_dim)
    w1 = jax.random.uniform(k1, (state_dim, hidden_dim), jnp.float32, -lim1, lim1)
    b1 = jax.random.uniform(k2, (1, hidden_dim), jnp.float32, -lim1, lim1)
    w2 = jax.random.uniform(k3, (hidden_dim, action_dim), jnp.float32, -lim2, lim2)
    b2 = jax.random.uniform(k4, (1, action_dim), jnp.float32, -lim2, lim2)
    return w1, b1, w2, b2


if __name__ == "__main__":
    batch = 2
    state_dim = 16
    hidden_dim = 32
    action_dim = 4
    action_bound = 2.0

    key = jax.random.PRNGKey(0)
    k_state, k_params = jax.random.split(key)
    state = jax.random.normal(k_state, (batch, state_dim), jnp.float32)
    w1, b1, w2, b2 = init_params(k_params, state_dim, hidden_dim, action_dim)

    w1p, b1p, w2p, b2p = prepare_params(w1, b1, w2, b2)
    out = policy_net_forward(state, w1p, b1p, w2p, b2p,
                             action_dim=action_dim, action_bound=action_bound)
    out = jax.block_until_ready(out)
    assert out.shape == (batch, action_dim)

    # Tight check: same bf16-fed math the kernel performs (f32 accumulate).
    xb = state.astype(jnp.bfloat16).astype(jnp.float32)
    w1b = w1.astype(jnp.bfloat16).astype(jnp.float32)
    w2b = w2.astype(jnp.bfloat16).astype(jnp.float32)
    h = jnp.maximum(xb @ w1b + b1, 0.0)
    hb = h.astype(jnp.bfloat16).astype(jnp.float32)
    ref_bf16 = jnp.tanh(hb @ w2b + b2) * action_bound
    assert jnp.allclose(out, ref_bf16, atol=1e-4, rtol=1e-4)

    # Loose check: original f32 PyTorch-equivalent forward.
    ref_f32 = jnp.tanh(jnp.maximum(state @ w1 + b1, 0.0) @ w2 + b2) * action_bound
    assert jnp.allclose(out, ref_f32, atol=5e-2, rtol=5e-2)

    print("KERNEL_OK")
</pallas_src>

<mosaic_0001>
module attributes {stable_mosaic.version = 11 : i64} {
  func.func @_policy_kernel(%arg0: i32, %arg1: memref<8x16xbf16, #tpu.memory_space<vmem>>, %arg2: memref<16x128xbf16, #tpu.memory_space<vmem>>, %arg3: memref<1x128xf32, #tpu.memory_space<vmem>>, %arg4: memref<128x128xbf16, #tpu.memory_space<vmem>>, %arg5: memref<1x128xf32, #tpu.memory_space<vmem>>, %arg6: memref<8x128xf32, #tpu.memory_space<vmem>>) attributes {dimension_semantics = [#tpu.dimension_semantics<parallel>], iteration_bounds = array<i64: 1>, scalar_prefetch = 0 : i64, scratch_operands = 0 : i64, tpu.core_type = #tpu.core_type<tc>, window_params = [{transform_indices = @transform_0, window_bounds = array<i64: 8, 16>}, {pipeline_mode = #tpu.pipeline_mode<synchronous>, transform_indices = @transform_1, window_bounds = array<i64: 16, 128>}, {pipeline_mode = #tpu.pipeline_mode<synchronous>, transform_indices = @transform_2, window_bounds = array<i64: 1, 128>}, {pipeline_mode = #tpu.pipeline_mode<synchronous>, transform_indices = @transform_3, window_bounds = array<i64: 128, 128>}, {pipeline_mode = #tpu.pipeline_mode<synchronous>, transform_indices = @transform_4, window_bounds = array<i64: 1, 128>}, {transform_indices = @transform_5, window_bounds = array<i64: 8, 128>}]} {
    %c0 = arith.constant 0 : index
    %c0_0 = arith.constant 0 : index
    %0 = vector.load %arg1[%c0, %c0_0] : memref<8x16xbf16, #tpu.memory_space<vmem>>, vector<8x16xbf16>
    %c0_1 = arith.constant 0 : index
    %c0_2 = arith.constant 0 : index
    %1 = vector.load %arg2[%c0_1, %c0_2] : memref<16x128xbf16, #tpu.memory_space<vmem>>, vector<16x128xbf16>
    %cst = arith.constant dense<0.000000e+00> : vector<8x128xf32>
    %2 = tpu.matmul %0, %1, %cst {dimension_numbers = #tpu.dot_dimension_numbers<[1], [0], [0], [1], [0, 0, 1, 1], [], []>} : vector<8x16xbf16>, vector<16x128xbf16>, vector<8x128xf32> -> vector<8x128xf32>
    %c0_3 = arith.constant 0 : index
    %c0_4 = arith.constant 0 : index
    %3 = vector.load %arg3[%c0_3, %c0_4] : memref<1x128xf32, #tpu.memory_space<vmem>>, vector<1x128xf32>
    %4 = vector.broadcast %3 : vector<1x128xf32> to vector<8x128xf32>
    %5 = arith.addf %2, %4 : vector<8x128xf32>
    %cst_5 = arith.constant 0.000000e+00 : f32
    %6 = vector.broadcast %cst_5 : f32 to vector<8x128xf32>
    %7 = arith.maximumf %5, %6 : vector<8x128xf32>
    %8 = arith.truncf %7 : vector<8x128xf32> to vector<8x128xbf16>
    %c0_6 = arith.constant 0 : index
    %c0_7 = arith.constant 0 : index
    %9 = vector.load %arg4[%c0_6, %c0_7] : memref<128x128xbf16, #tpu.memory_space<vmem>>, vector<128x128xbf16>
    %cst_8 = arith.constant dense<0.000000e+00> : vector<8x128xf32>
    %10 = tpu.matmul %8, %9, %cst_8 {dimension_numbers = #tpu.dot_dimension_numbers<[1], [0], [0], [1], [0, 0, 1, 1], [], []>} : vector<8x128xbf16>, vector<128x128xbf16>, vector<8x128xf32> -> vector<8x128xf32>
    %c0_9 = arith.constant 0 : index
    %c0_10 = arith.constant 0 : index
    %11 = vector.load %arg5[%c0_9, %c0_10] : memref<1x128xf32, #tpu.memory_space<vmem>>, vector<1x128xf32>
    %12 = vector.broadcast %11 : vector<1x128xf32> to vector<8x128xf32>
    %13 = arith.addf %10, %12 : vector<8x128xf32>
    %14 = math.tanh %13 : vector<8x128xf32>
    %cst_11 = arith.constant 2.000000e+00 : f32
    %15 = vector.broadcast %cst_11 : f32 to vector<8x128xf32>
    %16 = arith.mulf %14, %15 : vector<8x128xf32>
    %c0_12 = arith.constant 0 : index
    %c0_13 = arith.constant 0 : index
    %17 = vector.load %arg6[%c0_12, %c0_13] : memref<8x128xf32, #tpu.memory_space<vmem>>, vector<8x128xf32>
    tpu.vector_store %arg6[%c0_12, %c0_13], %16 {strides = array<i32>} : memref<8x128xf32, #tpu.memory_space<vmem>>, vector<8x128xf32>,
    return
  }
  func.func @transform_0(%arg0: i32) -> (i32, i32) {
    %c0_i32 = arith.constant 0 : i32
    %c0_i32_0 = arith.constant 0 : i32
    return %arg0, %c0_i32 : i32, i32
  }
  func.func @transform_1(%arg0: i32) -> (i32, i32) {
    %c0_i32 = arith.constant 0 : i32
    %c0_i32_0 = arith.constant 0 : i32
    %c0_i32_1 = arith.constant 0 : i32
    return %c0_i32, %c0_i32_0 : i32, i32
  }
  func.func @transform_2(%arg0: i32) -> (i32, i32) {
    %c0_i32 = arith.constant 0 : i32
    %c0_i32_0 = arith.constant 0 : i32
    %c0_i32_1 = arith.constant 0 : i32
    return %c0_i32, %c0_i32_0 : i32, i32
  }
  func.func @transform_3(%arg0: i32) -> (i32, i32) {
    %c0_i32 = arith.constant 0 : i32
    %c0_i32_0 = arith.constant 0 : i32
    %c0_i32_1 = arith.constant 0 : i32
    return %c0_i32, %c0_i32_0 : i32, i32
  }
  func.func @transform_4(%arg0: i32) -> (i32, i32) {
    %c0_i32 = arith.constant 0 : i32
    %c0_i32_0 = arith.constant 0 : i32
    %c0_i32_1 = arith.constant 0 : i32
    return %c0_i32, %c0_i32_0 : i32, i32
  }
  func.func @transform_5(%arg0: i32) -> (i32, i32) {
    %c0_i32 = arith.constant 0 : i32
    %c0_i32_0 = arith.constant 0 : i32
    return %arg0, %c0_i32 : i32, i32
  }
}

</mosaic_0001>

<llo_original>
// kernel: tpu_custom_call.1
$region0: #{tpu_custom_call.1}
  #allocation0 [shape = 'u32[]', space=smem, size = 0x4, offset = 0x4, fixed_abs, tag = 'smem constant byte address 0x4 - core index']
  #allocation1 [shape = 'u32[144,128]{1,0:T(1,128)}', space=vmem, size = 0x12000, scoped, tag = 'internal scratch']
  %s0 = inlined_call_operand.hbm [shape: bf16[8,16], index: 0, kind: input, shape index: {}]
  %s1 = inlined_call_operand.hbm [shape: bf16[16,128], index: 1, kind: input, shape index: {}]
  %s2 = inlined_call_operand.vmem [shape: f32[1,128], index: 2, kind: input, shape index: {}]
  %s3 = inlined_call_operand.hbm [shape: bf16[128,128], index: 3, kind: input, shape index: {}]
  %s4 = inlined_call_operand.vmem [shape: f32[1,128], index: 4, kind: input, shape index: {}]
  %s5 = inlined_call_operand.hbm [shape: f32[8,128], index: 5, kind: output, shape index: {}]
  %s6 = sld [smem:[#allocation0]]
  $region42: #{tpu_custom_call.1} parent=0
    _
  %s8 = ssub.s32 1, %s6
  %s9 = scalar_select 0, %s8, %s6
  $region1: #{tpu_custom_call.1} parent=0
    #allocation2 [shape = 'u8[2048]{0}', space=vmem, size = 0x800, scoped, tag = 'input window, operand 0, single buffered']
    #allocation3 [shape = 's32[1]{0}', space=sflag, size = 0x4, scoped, tag = 'scoped memory for tpu_custom_call.1']
    #allocation4 [shape = 's32[1]{0}', space=sflag, size = 0x4, scoped, tag = 'scoped memory for tpu_custom_call.1']
    #allocation5 [shape = 'u8[4096]{0}', space=vmem, size = 0x1000, scoped, tag = 'input window, operand 1, single buffered']
    #allocation6 [shape = 's32[1]{0}', space=sflag, size = 0x4, scoped, tag = 'scoped memory for tpu_custom_call.1']
    #allocation7 [shape = 'u8[32768]{0}', space=vmem, size = 0x8000, scoped, tag = 'input window, operand 3, single buffered']
    #allocation8 [shape = 'u8[4096]{0}', space=vmem, size = 0x1000, scoped, tag = 'output window, operand 0, single buffered']
    %10 = vsyncpa [#allocation3], 0
    %11 = vsyncpa [#allocation6], 0
    %12 = vsyncpa [#allocation4], 0
    // Predicated region
    $region2: #{tpu_custom_call.1} parent=1 // pred_check
      _
    $region3: #{tpu_custom_call.1} parent=1 // pred_check_branch
      %14 = sbr.rel (0) target = $region5
    $region4: #{tpu_custom_call.1} parent=1 // pred_region
      %s16 = ssub.s32 64, 64
      %17 = vsyncadd [#allocation3], %s16
      %s19 = sshll.u32 [#allocation2], 4
      %s20 = int_to_ptr.vmem [resolvable:$true] %s19
      %22 = dma.hbm_to_vmem [thread:$0]  %s0, 64, %s20, [#allocation3]
    $region5: #{tpu_custom_call.1} parent=1 // pred_fallthru
      _
    // Predicated region
    $region6: #{tpu_custom_call.1} parent=1 // pred_check
      _
    $region7: #{tpu_custom_call.1} parent=1 // pred_check_branch
      %24 = sbr.rel (0) target = $region9
    $region8: #{tpu_custom_call.1} parent=1 // pred_region
      %s26 = ssub.s32 128, 128
      %27 = vsyncadd [#allocation6], %s26
      %s28 = sshll.u32 [#allocation5], 4
      %s29 = int_to_ptr.vmem [resolvable:$true] %s28
      %34 = dma.hbm_to_vmem [thread:$0]  %s1, 128, %s29, [#allocation6], 64, 64, 4
    $region9: #{tpu_custom_call.1} parent=1 // pred_fallthru
      _
    // Predicated region
    $region10: #{tpu_custom_call.1} parent=1 // pred_check
      _
    $region11: #{tpu_custom_call.1} parent=1 // pred_check_branch
      %36 = sbr.rel (0) target = $region13
    $region12: #{tpu_custom_call.1} parent=1 // pred_region
      _
    $region13: #{tpu_custom_call.1} parent=1 // pred_fallthru
      _
    // Predicated region
    $region14: #{tpu_custom_call.1} parent=1 // pred_check
      _
    $region15: #{tpu_custom_call.1} parent=1 // pred_check_branch
      %38 = sbr.rel (0) target = $region17
    $region16: #{tpu_custom_call.1} parent=1 // pred_region
      %s40 = ssub.s32 1024, 1024
      %41 = vsyncadd [#allocation6], %s40
      %s42 = sshll.u32 [#allocation7], 4
      %s43 = int_to_ptr.vmem [resolvable:$true] %s42
      %48 = dma.hbm_to_vmem [thread:$0]  %s3, 1024, %s43, [#allocation6], 64, 64, 4
    $region17: #{tpu_custom_call.1} parent=1 // pred_fallthru
      _
    // Predicated region
    $region18: #{tpu_custom_call.1} parent=1 // pred_check
      _
    $region19: #{tpu_custom_call.1} parent=1 // pred_check_branch
      %50 = sbr.rel (0) target = $region21
    $region20: #{tpu_custom_call.1} parent=1 // pred_region
      _
    $region21: #{tpu_custom_call.1} parent=1 // pred_fallthru
      _
    // Predicated region
    $region22: #{tpu_custom_call.1} parent=1 // pred_check
      _
    $region23: #{tpu_custom_call.1} parent=1 // pred_check_branch
      %52 = sbr.rel (0) target = $region25
    $region24: #{tpu_custom_call.1} parent=1 // pred_region
      %53 = dma.done [#allocation3], 64
    $region25: #{tpu_custom_call.1} parent=1 // pred_fallthru
      _
    // Predicated region
    $region26: #{tpu_custom_call.1} parent=1 // pred_check
      _
    $region27: #{tpu_custom_call.1} parent=1 // pred_check_branch
      %55 = sbr.rel (0) target = $region29
    $region28: #{tpu_custom_call.1} parent=1 // pred_region
      %56 = dma.done [#allocation6], 128
    $region29: #{tpu_custom_call.1} parent=1 // pred_fallthru
      _
    // Predicated region
    $region30: #{tpu_custom_call.1} parent=1 // pred_check
      _
    $region31: #{tpu_custom_call.1} parent=1 // pred_check_branch
      %58 = sbr.rel (0) target = $region33
    $region32: #{tpu_custom_call.1} parent=1 // pred_region
      %59 = dma.done [#allocation6], 1024
    $region33: #{tpu_custom_call.1} parent=1 // pred_fallthru
      _
    %v61 = vld [vmem:[#allocation2] sm:$0xf]
    %v62 = vld [vmem:[#allocation5] sm:$0xf]
    %v63 = vld [vmem:[#allocation5 + $0x4] sm:$0xf]
    %v64 = vld [vmem:[%s2] sm:$0x1]
    %v66 = vlaneseq
    %v67 = vshrl.u32 %v66, 7
    %v68 = vsub.s32 0, %v67
    %v69 = vrot.slane %v64, %v68
    %v73 = vunpack.c.l.b16 %v62
    %v74 = vunpack.c.l.b16 %v63
    %v75 = vpack.c.b16 %v74, %v73
    %vm77 = vcmask 130048
    %v79 = vsel %vm77, %v61, 0
    %81 = vmatprep.subr.bf16.mxu0 0
    %82 = vmatpush1.bf16.msra.mxu0 0
    %83 = vmatprep.subr.bf16.mxu0 0
    %84 = vmatpush1.bf16.msra.mxu0 0
    %85 = vmatprep.subr.bf16.mxu0 0
    %86 = vmatpush1.bf16.msra.mxu0 0
    %87 = vmatprep.subr.bf16.mxu0 0
    %88 = vmatpush1.bf16.msra.mxu0 0
    %89 = vmatprep.subr.bf16.mxu0 0
    %90 = vmatpush1.bf16.msra.mxu0 0
    %91 = vmatprep.subr.bf16.mxu0 0
    %92 = vmatpush1.bf16.msra.mxu0 0
    %93 = vmatprep.subr.bf16.mxu0 0
    %94 = vmatpush1.bf16.msra.mxu0 0
    %95 = vmatprep.subr.bf16.mxu0 0
    %96 = vmatpush1.bf16.msra.mxu0 %v75
    %97 = vmatprep.subr.bf16.mxu0 0
    %98 = vmatpush2.bf16.msra.mxu0 0
    %99 = vmatprep.subr.bf16.mxu0 0
    %100 = vmatpush2.bf16.msra.mxu0 0
    %101 = vmatprep.subr.bf16.mxu0 0
    %102 = vmatpush2.bf16.msra.mxu0 0
    %103 = vmatprep.subr.bf16.mxu0 0
    %104 = vmatpush2.bf16.msra.mxu0 0
    %105 = vmatprep.subr.bf16.mxu0 0
    %106 = vmatpush2.bf16.msra.mxu0 0
    %107 = vmatprep.subr.bf16.mxu0 0
    %108 = vmatpush2.bf16.msra.mxu0 0
    %109 = vmatprep.subr.bf16.mxu0 0
    %110 = vmatpush2.bf16.msra.mxu0 0
    %111 = vmatprep.subr.bf16.mxu0 0
    %112 = vmatpush2.bf16.msra.mxu0 0
    %113 = vmatprep.mubr.bf16.mxu0 0
    %114 = vmatmul.mubr.bf16.gmra.mxu0 %v79
    %v115 = vpop.f32.mrf.mxu0
    %v116 = vadd.f32 %v69, %v115
    %v117 = vpop.f32.mrf.mxu0
    %v118 = vpop.f32.mrf.mxu0
    %v119 = vpop.f32.mrf.mxu0
    %120 = vdwg.mxu0
    %v121 = vmax.f32 %v116, 0.0
    %v122 = vpack.c.bf16 %v121, %v121
    %v123 = vld [vmem:[#allocation7] sm:$0xf]
    %v124 = vld [vmem:[#allocation7 + $0x4] sm:$0xf]
    %v125 = vld [vmem:[#allocation7 + $0x8] sm:$0xf]
    %v126 = vld [vmem:[#allocation7 + $0xc] sm:$0xf]
    %v127 = vld [vmem:[#allocation7 + $0x10] sm:$0xf]
    %v128 = vld [vmem:[#allocation7 + $0x14] sm:$0xf]
    %v129 = vld [vmem:[#allocation7 + $0x18] sm:$0xf]
    %v130 = vld [vmem:[#allocation7 + $0x1c] sm:$0xf]
    %v131 = vld [vmem:[#allocation7 + $0x20] sm:$0xf]
    %v132 = vld [vmem:[#allocation7 + $0x24] sm:$0xf]
    %v133 = vld [vmem:[#allocation7 + $0x28] sm:$0xf]
    %v134 = vld [vmem:[#allocation7 + $0x2c] sm:$0xf]
    %v135 = vld [vmem:[#allocation7 + $0x30] sm:$0xf]
    %v136 = vld [vmem:[#allocation7 + $0x34] sm:$0xf]
    %v137 = vld [vmem:[#allocation7 + $0x38] sm:$0xf]
    %v138 = vld [vmem:[#allocation7 + $0x3c] sm:$0xf]
    %v139 = vld [vmem:[%s4] sm:$0x1]
    %v141 = vlaneseq
    %v142 = vshrl.u32 %v141, 7
    %v143 = vsub.s32 0, %v142
    %v144 = vrot.slane %v139, %v143
    %v162 = vunpack.c.l.b16 %v123
    %v163 = vunpack.c.l.b16 %v124
    %v164 = vunpack.c.l.b16 %v125
    %v165 = vunpack.c.l.b16 %v126
    %v166 = vunpack.c.l.b16 %v127
    %v167 = vunpack.c.l.b16 %v128
    %v168 = vunpack.c.l.b16 %v129
    %v169 = vunpack.c.l.b16 %v130
    %v170 = vunpack.c.l.b16 %v131
    %v171 = vunpack.c.l.b16 %v132
    %v172 = vunpack.c.l.b16 %v133
    %v173 = vunpack.c.l.b16 %v134
    %v174 = vunpack.c.l.b16 %v135
    %v175 = vunpack.c.l.b16 %v136
    %v176 = vunpack.c.l.b16 %v137
    %v177 = vunpack.c.l.b16 %v138
    %v178 = vpack.c.b16 %v163, %v162
    %v179 = vpack.c.b16 %v165, %v164
    %v180 = vpack.c.b16 %v167, %v166
    %v181 = vpack.c.b16 %v169, %v168
    %v182 = vpack.c.b16 %v171, %v170
    %v183 = vpack.c.b16 %v173, %v172
    %v184 = vpack.c.b16 %v175, %v174
    %v185 = vpack.c.b16 %v177, %v176
    %194 = vmatprep.subr.bf16.mxu0 0
    %195 = vmatpush1.bf16.msra.mxu0 %v185
    %196 = vmatprep.subr.bf16.mxu0 0
    %197 = vmatpush1.bf16.msra.mxu0 %v184
    %198 = vmatprep.subr.bf16.mxu0 0
    %199 = vmatpush1.bf16.msra.mxu0 %v183
    %200 = vmatprep.subr.bf16.mxu0 0
    %201 = vmatpush1.bf16.msra.mxu0 %v182
    %202 = vmatprep.subr.bf16.mxu0 0
    %203 = vmatpush1.bf16.msra.mxu0 %v181
    %204 = vmatprep.subr.bf16.mxu0 0
    %205 = vmatpush1.bf16.msra.mxu0 %v180
    %206 = vmatprep.subr.bf16.mxu0 0
    %207 = vmatpush1.bf16.msra.mxu0 %v179
    %208 = vmatprep.subr.bf16.mxu0 0
    %209 = vmatpush1.bf16.msra.mxu0 %v178
    %210 = vmatprep.subr.bf16.mxu0 0
    %211 = vmatpush2.bf16.msra.mxu0 0
    %212 = vmatprep.subr.bf16.mxu0 0
    %213 = vmatpush2.bf16.msra.mxu0 0
    %214 = vmatprep.subr.bf16.mxu0 0
    %215 = vmatpush2.bf16.msra.mxu0 0
    %216 = vmatprep.subr.bf16.mxu0 0
    %217 = vmatpush2.bf16.msra.mxu0 0
    %218 = vmatprep.subr.bf16.mxu0 0
    %219 = vmatpush2.bf16.msra.mxu0 0
    %220 = vmatprep.subr.bf16.mxu0 0
    %221 = vmatpush2.bf16.msra.mxu0 0
    %222 = vmatprep.subr.bf16.mxu0 0
    %223 = vmatpush2.bf16.msra.mxu0 0
    %224 = vmatprep.subr.bf16.mxu0 0
    %225 = vmatpush2.bf16.msra.mxu0 0
    %226 = vmatprep.mubr.bf16.mxu0 0
    %227 = vmatmul.mubr.bf16.gmra.mxu0 %v122
    %v228 = vpop.f32.mrf.mxu0
    %v229 = vadd.f32 %v144, %v228
    %v230 = vpop.f32.mrf.mxu0
    %v231 = vpop.f32.mrf.mxu0
    %v232 = vpop.f32.mrf.mxu0
    %233 = vdwg.mxu0
    %v234 = vtanh.pop %v229
    %v235 = vmul.f32 %v234, 2.0
    %236 = vst [vmem:[#allocation8] sm:$0xff] %v235
    // Predicated region
    $region34: #{tpu_custom_call.1} parent=1 // pred_check
      _
    $region35: #{tpu_custom_call.1} parent=1 // pred_check_branch
      %238 = sbr.rel (0) target = $region37
    $region36: #{tpu_custom_call.1} parent=1 // pred_region
      %s240 = ssub.s32 128, 128
      %241 = vsyncadd [#allocation4], %s240
      %s243 = sshll.u32 [#allocation8], 4
      %s244 = int_to_ptr.vmem [resolvable:$true] %s243
      %246 = dma.vmem_to_hbm [thread:$0]  %s244, 128, %s5, [#allocation4]
    $region37: #{tpu_custom_call.1} parent=1 // pred_fallthru
      _
    // Predicated region
    $region38: #{tpu_custom_call.1} parent=1 // pred_check
      _
    $region39: #{tpu_custom_call.1} parent=1 // pred_check_branch
      %248 = sbr.rel (0) target = $region41
    $region40: #{tpu_custom_call.1} parent=1 // pred_region
      %249 = dma.done [#allocation4], 128
    $region41: #{tpu_custom_call.1} parent=1 // pred_fallthru
      _
    %250 = vsyncpa [#allocation3], 1
    %251 = vsyncpa [#allocation6], 1
    %252 = vsyncpa [#allocation4], 1

</llo_original>
